<compile_context>
chip_gen: v7x
topology: tpu7x:2x2x1
jax: 0.10.0
libtpu: 0.0.40
codegen_flags: <defaults>
</compile_context>

<pallas_src>
import jax
import jax.numpy as jnp
from jax.experimental import pallas as pl
from jax.experimental.pallas import tpu as pltpu

LANE = 128


def _round_up(x, m):
    return ((x + m - 1) // m) * m


def _mlp_kernel(x_ref, w1_ref, b1_ref, w2_ref, b2_ref, w3_ref, b3_ref, o_ref):
    # One (TB, n_in) batch tile per grid step; lane-padded weights/biases are VMEM-resident
    # (constant index_map), so the only streamed arrays are x and the 1-column output.
    x = x_ref[...]

    h1 = jnp.dot(x, w1_ref[...], preferred_element_type=jnp.float32) + b1_ref[...]
    h1 = jnp.maximum(h1, 0.0)                                   # ReLU (f32)

    h2 = jnp.dot(h1, w2_ref[...], preferred_element_type=jnp.float32) + b2_ref[...]
    h2 = jnp.maximum(h2, 0.0)                                   # ReLU (f32)

    h3 = jnp.dot(h2, w3_ref[...], preferred_element_type=jnp.float32) + b3_ref[...]
    # Sigmoid only the real output column; store a narrow (TB, 1) result.
    o_ref[...] = jax.nn.sigmoid(h3[:, :1]).astype(o_ref.dtype)


def prepare_mlp_params(params):
    """One-time prep (hoisted out of the forward path): zero-pad hidden widths to full
    128-lane tiles. Exact: ReLU(0)=0 and zero rows/cols of the next weight contribute 0."""
    w1, b1, w2, b2, w3, b3 = params
    h1w, h2w, h3w = w1.shape[1], w2.shape[1], w3.shape[1]
    H1, H2, H3 = _round_up(h1w, LANE), _round_up(h2w, LANE), _round_up(h3w, LANE)

    w1p = jnp.pad(w1, ((0, 0), (0, H1 - h1w)))
    b1p = jnp.pad(b1, ((0, 0), (0, H1 - h1w)))
    w2p = jnp.pad(w2, ((0, H1 - h1w), (0, H2 - h2w)))
    b2p = jnp.pad(b2, ((0, 0), (0, H2 - h2w)))
    w3p = jnp.pad(w3, ((0, H2 - h2w), (0, H3 - h3w)))
    b3p = jnp.pad(b3, ((0, 0), (0, H3 - h3w)))
    return (w1p, b1p, w2p, b2p, w3p, b3p)


def mlp_forward(x, prepared_params, *, tb=4096):
    """x: (B, n_inputs) float32 -> (B, 1) float32. prepared_params from prepare_mlp_params()."""
    w1p, b1p, w2p, b2p, w3p, b3p = prepared_params
    B, n_in = x.shape
    H1, H2, H3 = w1p.shape[1], w2p.shape[1], w3p.shape[1]

    # Batch tile: multiple of 8 sublanes; no wrapper-side padding of x (Pallas masks the
    # partial final block on store; garbage OOB input rows are never written back and there
    # is no cross-row reduction). Mid-size batches split into >=2 grid steps so the
    # "parallel" batch axis can shard across both v7x TensorCores.
    tb = max(8, _round_up(tb, 8))
    if 2048 <= B <= tb:
        TB = _round_up(pl.cdiv(B, 2), 8)
    else:
        TB = min(tb, _round_up(B, 8))
    grid = (pl.cdiv(B, TB),)

    resident = lambda i: (0, 0)   # weights / biases: same block every step -> stay in VMEM

    # True (tiny) cost: ~400 MACs/row; HBM traffic = x read + 1-col output write + weights.
    itemsize = x.dtype.itemsize
    flops = 2 * B * (n_in * 10 + 10 * 8 + 8 * 1)
    bytes_accessed = (B * n_in * itemsize + B * 4
                      + sum(int(a.size) * a.dtype.itemsize for a in prepared_params))

    out = pl.pallas_call(
        _mlp_kernel,
        out_shape=jax.ShapeDtypeStruct((B, 1), jnp.float32),
        grid=grid,
        in_specs=[
            pl.BlockSpec((TB, n_in), lambda i: (i, 0)),   # x: streamed batch tiles
            pl.BlockSpec((n_in, H1), resident),           # W1
            pl.BlockSpec((1, H1), resident),              # b1
            pl.BlockSpec((H1, H2), resident),             # W2
            pl.BlockSpec((1, H2), resident),              # b2
            pl.BlockSpec((H2, H3), resident),             # W3
            pl.BlockSpec((1, H3), resident),              # b3
        ],
        out_specs=pl.BlockSpec((TB, 1), lambda i: (i, 0)),
        compiler_params=pltpu.CompilerParams(
            dimension_semantics=("parallel",),            # shard batch grid across v7x TCs
        ),
        cost_estimate=pl.CostEstimate(
            flops=flops, transcendentals=B, bytes_accessed=bytes_accessed),
    )(x, w1p, b1p, w2p, b2p, w3p, b3p)
    return out


def init_mlp_params(key, n_inputs):
    """Deterministic init mirroring the PyTorch module's __init__ distributions."""
    k = jax.random.split(key, 6)

    def kaiming_uniform(key, fan_in, fan_out):
        # gain=sqrt(2) for relu; bound = gain * sqrt(3 / fan_in)
        bound = jnp.sqrt(2.0) * jnp.sqrt(3.0 / fan_in)
        return jax.random.uniform(key, (fan_in, fan_out), jnp.float32, -bound, bound)

    def xavier_uniform(key, fan_in, fan_out):
        bound = jnp.sqrt(6.0 / (fan_in + fan_out))
        return jax.random.uniform(key, (fan_in, fan_out), jnp.float32, -bound, bound)

    def bias_uniform(key, fan_in, fan_out):
        # PyTorch Linear default bias init: U(-1/sqrt(fan_in), 1/sqrt(fan_in))
        bound = 1.0 / jnp.sqrt(fan_in)
        return jax.random.uniform(key, (1, fan_out), jnp.float32, -bound, bound)

    w1 = kaiming_uniform(k[0], n_inputs, 10)
    b1 = bias_uniform(k[1], n_inputs, 10)
    w2 = kaiming_uniform(k[2], 10, 8)
    b2 = bias_uniform(k[3], 10, 8)
    w3 = xavier_uniform(k[4], 8, 1)
    b3 = bias_uniform(k[5], 8, 1)
    return (w1, b1, w2, b2, w3, b3)


def _reference(x, params):
    w1, b1, w2, b2, w3, b3 = params
    return jax.nn.sigmoid(
        jnp.maximum(jnp.maximum(x @ w1 + b1, 0.0) @ w2 + b2, 0.0) @ w3 + b3
    )


if __name__ == "__main__":
    key = jax.random.PRNGKey(0)
    kp, kx, kx2 = jax.random.split(key, 3)

    n_inputs = 32
    params = init_mlp_params(kp, n_inputs)
    prepared = prepare_mlp_params(params)          # one-time weight/bias lane padding

    # Small batch, single grid step.
    batch = 8
    x = jax.random.normal(kx, (batch, n_inputs), dtype=jnp.float32)
    out = mlp_forward(x, prepared)
    jax.block_until_ready(out)
    ref = _reference(x, params)
    assert out.shape == (batch, 1)
    assert jnp.allclose(out, ref, atol=2e-5), "single-tile mismatch vs reference"

    # Multi-tile grid with a partial final block (600 = 2*256 + 88): exercises batch tiling
    # without any wrapper-side padding of x (OOB rows are masked on store).
    batch2 = 600
    x2 = jax.random.normal(kx2, (batch2, n_inputs), dtype=jnp.float32)
    out2 = mlp_forward(x2, prepared, tb=256)       # grid = (3,)
    jax.block_until_ready(out2)
    ref2 = _reference(x2, params)
    assert out2.shape == (batch2, 1)
    assert jnp.allclose(out2, ref2, atol=2e-5), "tiled mismatch vs reference"

    print("KERNEL_OK")
</pallas_src>

<mosaic_0001>
module attributes {stable_mosaic.version = 11 : i64} {
  func.func @_mlp_kernel(%arg0: i32, %arg1: memref<8x32xf32, #tpu.memory_space<vmem>>, %arg2: memref<32x128xf32, #tpu.memory_space<vmem>>, %arg3: memref<1x128xf32, #tpu.memory_space<vmem>>, %arg4: memref<128x128xf32, #tpu.memory_space<vmem>>, %arg5: memref<1x128xf32, #tpu.memory_space<vmem>>, %arg6: memref<128x128xf32, #tpu.memory_space<vmem>>, %arg7: memref<1x128xf32, #tpu.memory_space<vmem>>, %arg8: memref<8x1xf32, #tpu.memory_space<vmem>>) attributes {dimension_semantics = [#tpu.dimension_semantics<parallel>], iteration_bounds = array<i64: 1>, scalar_prefetch = 0 : i64, scratch_operands = 0 : i64, tpu.core_type = #tpu.core_type<tc>, window_params = [{transform_indices = @transform_0, window_bounds = array<i64: 8, 32>}, {pipeline_mode = #tpu.pipeline_mode<synchronous>, transform_indices = @transform_1, window_bounds = array<i64: 32, 128>}, {pipeline_mode = #tpu.pipeline_mode<synchronous>, transform_indices = @transform_2, window_bounds = array<i64: 1, 128>}, {pipeline_mode = #tpu.pipeline_mode<synchronous>, transform_indices = @transform_3, window_bounds = array<i64: 128, 128>}, {pipeline_mode = #tpu.pipeline_mode<synchronous>, transform_indices = @transform_4, window_bounds = array<i64: 1, 128>}, {pipeline_mode = #tpu.pipeline_mode<synchronous>, transform_indices = @transform_5, window_bounds = array<i64: 128, 128>}, {pipeline_mode = #tpu.pipeline_mode<synchronous>, transform_indices = @transform_6, window_bounds = array<i64: 1, 128>}, {transform_indices = @transform_7, window_bounds = array<i64: 8, 1>}]} {
    %c0 = arith.constant 0 : index
    %c0_0 = arith.constant 0 : index
    %0 = vector.load %arg1[%c0, %c0_0] : memref<8x32xf32, #tpu.memory_space<vmem>>, vector<8x32xf32>
    %c0_1 = arith.constant 0 : index
    %c0_2 = arith.constant 0 : index
    %1 = vector.load %arg2[%c0_1, %c0_2] : memref<32x128xf32, #tpu.memory_space<vmem>>, vector<32x128xf32>
    %cst = arith.constant dense<0.000000e+00> : vector<8x128xf32>
    %2 = tpu.matmul %0, %1, %cst {dimension_numbers = #tpu.dot_dimension_numbers<[1], [0], [0], [1], [0, 0, 1, 1], [], []>} : vector<8x32xf32>, vector<32x128xf32>, vector<8x128xf32> -> vector<8x128xf32>
    %c0_3 = arith.constant 0 : index
    %c0_4 = arith.constant 0 : index
    %3 = vector.load %arg3[%c0_3, %c0_4] : memref<1x128xf32, #tpu.memory_space<vmem>>, vector<1x128xf32>
    %4 = vector.broadcast %3 : vector<1x128xf32> to vector<8x128xf32>
    %5 = arith.addf %2, %4 : vector<8x128xf32>
    %cst_5 = arith.constant 0.000000e+00 : f32
    %6 = vector.broadcast %cst_5 : f32 to vector<8x128xf32>
    %7 = arith.maximumf %5, %6 : vector<8x128xf32>
    %c0_6 = arith.constant 0 : index
    %c0_7 = arith.constant 0 : index
    %8 = vector.load %arg4[%c0_6, %c0_7] : memref<128x128xf32, #tpu.memory_space<vmem>>, vector<128x128xf32>
    %cst_8 = arith.constant dense<0.000000e+00> : vector<8x128xf32>
    %9 = tpu.matmul %7, %8, %cst_8 {dimension_numbers = #tpu.dot_dimension_numbers<[1], [0], [0], [1], [0, 0, 1, 1], [], []>} : vector<8x128xf32>, vector<128x128xf32>, vector<8x128xf32> -> vector<8x128xf32>
    %c0_9 = arith.constant 0 : index
    %c0_10 = arith.constant 0 : index
    %10 = vector.load %arg5[%c0_9, %c0_10] : memref<1x128xf32, #tpu.memory_space<vmem>>, vector<1x128xf32>
    %11 = vector.broadcast %10 : vector<1x128xf32> to vector<8x128xf32>
    %12 = arith.addf %9, %11 : vector<8x128xf32>
    %cst_11 = arith.constant 0.000000e+00 : f32
    %13 = vector.broadcast %cst_11 : f32 to vector<8x128xf32>
    %14 = arith.maximumf %12, %13 : vector<8x128xf32>
    %c0_12 = arith.constant 0 : index
    %c0_13 = arith.constant 0 : index
    %15 = vector.load %arg6[%c0_12, %c0_13] : memref<128x128xf32, #tpu.memory_space<vmem>>, vector<128x128xf32>
    %cst_14 = arith.constant dense<0.000000e+00> : vector<8x128xf32>
    %16 = tpu.matmul %14, %15, %cst_14 {dimension_numbers = #tpu.dot_dimension_numbers<[1], [0], [0], [1], [0, 0, 1, 1], [], []>} : vector<8x128xf32>, vector<128x128xf32>, vector<8x128xf32> -> vector<8x128xf32>
    %c0_15 = arith.constant 0 : index
    %c0_16 = arith.constant 0 : index
    %17 = vector.load %arg7[%c0_15, %c0_16] : memref<1x128xf32, #tpu.memory_space<vmem>>, vector<1x128xf32>
    %18 = vector.broadcast %17 : vector<1x128xf32> to vector<8x128xf32>
    %19 = arith.addf %16, %18 : vector<8x128xf32>
    %20 = vector.extract_strided_slice %19 {offsets = [0, 0], sizes = [8, 1], strides = [1, 1]} : vector<8x128xf32> to vector<8x1xf32>
    %21 = arith.negf %20 : vector<8x1xf32>
    %22 = math.exp %21 : vector<8x1xf32>
    %cst_17 = arith.constant 1.000000e+00 : f32
    %23 = vector.broadcast %cst_17 : f32 to vector<8x1xf32>
    %24 = arith.addf %23, %22 : vector<8x1xf32>
    %25 = arith.divf %23, %24 : vector<8x1xf32>
    %c0_18 = arith.constant 0 : index
    %c0_19 = arith.constant 0 : index
    %26 = vector.load %arg8[%c0_18, %c0_19] : memref<8x1xf32, #tpu.memory_space<vmem>>, vector<8x1xf32>
    tpu.vector_store %arg8[%c0_18, %c0_19], %25 {strides = array<i32>} : memref<8x1xf32, #tpu.memory_space<vmem>>, vector<8x1xf32>,
    return
  }
  func.func @transform_0(%arg0: i32) -> (i32, i32) {
    %c0_i32 = arith.constant 0 : i32
    %c0_i32_0 = arith.constant 0 : i32
    return %arg0, %c0_i32 : i32, i32
  }
  func.func @transform_1(%arg0: i32) -> (i32, i32) {
    %c0_i32 = arith.constant 0 : i32
    %c0_i32_0 = arith.constant 0 : i32
    %c0_i32_1 = arith.constant 0 : i32
    return %c0_i32, %c0_i32_0 : i32, i32
  }
  func.func @transform_2(%arg0: i32) -> (i32, i32) {
    %c0_i32 = arith.constant 0 : i32
    %c0_i32_0 = arith.constant 0 : i32
    %c0_i32_1 = arith.constant 0 : i32
    return %c0_i32, %c0_i32_0 : i32, i32
  }
  func.func @transform_3(%arg0: i32) -> (i32, i32) {
    %c0_i32 = arith.constant 0 : i32
    %c0_i32_0 = arith.constant 0 : i32
    %c0_i32_1 = arith.constant 0 : i32
    return %c0_i32, %c0_i32_0 : i32, i32
  }
  func.func @transform_4(%arg0: i32) -> (i32, i32) {
    %c0_i32 = arith.constant 0 : i32
    %c0_i32_0 = arith.constant 0 : i32
    %c0_i32_1 = arith.constant 0 : i32
    return %c0_i32, %c0_i32_0 : i32, i32
  }
  func.func @transform_5(%arg0: i32) -> (i32, i32) {
    %c0_i32 = arith.constant 0 : i32
    %c0_i32_0 = arith.constant 0 : i32
    %c0_i32_1 = arith.constant 0 : i32
    return %c0_i32, %c0_i32_0 : i32, i32
  }
  func.func @transform_6(%arg0: i32) -> (i32, i32) {
    %c0_i32 = arith.constant 0 : i32
    %c0_i32_0 = arith.constant 0 : i32
    %c0_i32_1 = arith.constant 0 : i32
    return %c0_i32, %c0_i32_0 : i32, i32
  }
  func.func @transform_7(%arg0: i32) -> (i32, i32) {
    %c0_i32 = arith.constant 0 : i32
    %c0_i32_0 = arith.constant 0 : i32
    return %arg0, %c0_i32 : i32, i32
  }
}

</mosaic_0001>

<llo_original>
// kernel: tpu_custom_call.1
$region0: #{tpu_custom_call.1}
  #allocation0 [shape = 'u32[]', space=smem, size = 0x4, offset = 0x4, fixed_abs, tag = 'smem constant byte address 0x4 - core index']
  #allocation1 [shape = 'u32[144,128]{1,0:T(1,128)}', space=vmem, size = 0x12000, scoped, tag = 'internal scratch']
  %s0 = inlined_call_operand.hbm [shape: f32[8,32], index: 0, kind: input, shape index: {}]
  %s1 = inlined_call_operand.hbm [shape: f32[32,128], index: 1, kind: input, shape index: {}]
  %s2 = inlined_call_operand.vmem [shape: f32[1,128], index: 2, kind: input, shape index: {}]
  %s3 = inlined_call_operand.hbm [shape: f32[128,128], index: 3, kind: input, shape index: {}]
  %s4 = inlined_call_operand.vmem [shape: f32[1,128], index: 4, kind: input, shape index: {}]
  %s5 = inlined_call_operand.hbm [shape: f32[128,128], index: 5, kind: input, shape index: {}]
  %s6 = inlined_call_operand.vmem [shape: f32[1,128], index: 6, kind: input, shape index: {}]
  %s7 = inlined_call_operand.vmem [shape: f32[8,1], index: 7, kind: output, shape index: {}]
  %s8 = sld [smem:[#allocation0]]
  $region54: #{tpu_custom_call.1} parent=0
    _
  %s10 = ssub.s32 1, %s8
  %s11 = scalar_select 0, %s10, %s8
  $region1: #{tpu_custom_call.1} parent=0
    #allocation2 [shape = 'u8[4096]{0}', space=vmem, size = 0x1000, scoped, tag = 'input window, operand 0, single buffered']
    #allocation3 [shape = 's32[1]{0}', space=sflag, size = 0x4, scoped, tag = 'scoped memory for tpu_custom_call.1']
    #allocation4 [shape = 'u8[16384]{0}', space=vmem, size = 0x4000, scoped, tag = 'input window, operand 1, single buffered']
    #allocation5 [shape = 's32[1]{0}', space=sflag, size = 0x4, scoped, tag = 'scoped memory for tpu_custom_call.1']
    #allocation6 [shape = 'u8[65536]{0}', space=vmem, size = 0x10000, scoped, tag = 'input window, operand 3, single buffered']
    #allocation7 [shape = 'u8[65536]{0}', space=vmem, size = 0x10000, scoped, tag = 'input window, operand 5, single buffered']
    #allocation8 [shape = 's32[1]{0}', space=sflag, size = 0x4, scoped, tag = 'scoped memory for tpu_custom_call.1']
    %12 = vsyncpa [#allocation3], 0
    %13 = vsyncpa [#allocation5], 0
    %14 = vsyncpa [#allocation8], 0
    // Predicated region
    $region2: #{tpu_custom_call.1} parent=1 // pred_check
      _
    $region3: #{tpu_custom_call.1} parent=1 // pred_check_branch
      %16 = sbr.rel (0) target = $region5
    $region4: #{tpu_custom_call.1} parent=1 // pred_region
      %s18 = ssub.s32 128, 128
      %19 = vsyncadd [#allocation3], %s18
      %s21 = sshll.u32 [#allocation2], 4
      %s22 = int_to_ptr.vmem [resolvable:$true] %s21
      %24 = dma.hbm_to_vmem [thread:$0]  %s0, 128, %s22, [#allocation3]
    $region5: #{tpu_custom_call.1} parent=1 // pred_fallthru
      _
    // Predicated region
    $region6: #{tpu_custom_call.1} parent=1 // pred_check
      _
    $region7: #{tpu_custom_call.1} parent=1 // pred_check_branch
      %26 = sbr.rel (0) target = $region9
    $region8: #{tpu_custom_call.1} parent=1 // pred_region
      %s28 = ssub.s32 512, 512
      %29 = vsyncadd [#allocation5], %s28
      %s30 = sshll.u32 [#allocation4], 4
      %s31 = int_to_ptr.vmem [resolvable:$true] %s30
      %36 = dma.hbm_to_vmem [thread:$0]  %s1, 512, %s31, [#allocation5], 128, 128, 8
    $region9: #{tpu_custom_call.1} parent=1 // pred_fallthru
      _
    // Predicated region
    $region10: #{tpu_custom_call.1} parent=1 // pred_check
      _
    $region11: #{tpu_custom_call.1} parent=1 // pred_check_branch
      %38 = sbr.rel (0) target = $region13
    $region12: #{tpu_custom_call.1} parent=1 // pred_region
      _
    $region13: #{tpu_custom_call.1} parent=1 // pred_fallthru
      _
    // Predicated region
    $region14: #{tpu_custom_call.1} parent=1 // pred_check
      _
    $region15: #{tpu_custom_call.1} parent=1 // pred_check_branch
      %40 = sbr.rel (0) target = $region17
    $region16: #{tpu_custom_call.1} parent=1 // pred_region
      %s42 = ssub.s32 2048, 2048
      %43 = vsyncadd [#allocation5], %s42
      %s44 = sshll.u32 [#allocation6], 4
      %s45 = int_to_ptr.vmem [resolvable:$true] %s44
      %50 = dma.hbm_to_vmem [thread:$0]  %s3, 2048, %s45, [#allocation5], 128, 128, 8
    $region17: #{tpu_custom_call.1} parent=1 // pred_fallthru
      _
    // Predicated region
    $region18: #{tpu_custom_call.1} parent=1 // pred_check
      _
    $region19: #{tpu_custom_call.1} parent=1 // pred_check_branch
      %52 = sbr.rel (0) target = $region21
    $region20: #{tpu_custom_call.1} parent=1 // pred_region
      _
    $region21: #{tpu_custom_call.1} parent=1 // pred_fallthru
      _
    // Predicated region
    $region22: #{tpu_custom_call.1} parent=1 // pred_check
      _
    $region23: #{tpu_custom_call.1} parent=1 // pred_check_branch
      %54 = sbr.rel (0) target = $region25
    $region24: #{tpu_custom_call.1} parent=1 // pred_region
      %s56 = ssub.s32 2048, 2048
      %57 = vsyncadd [#allocation8], %s56
      %s58 = sshll.u32 [#allocation7], 4
      %s59 = int_to_ptr.vmem [resolvable:$true] %s58
      %64 = dma.hbm_to_vmem [thread:$0]  %s5, 2048, %s59, [#allocation8], 128, 128, 8
    $region25: #{tpu_custom_call.1} parent=1 // pred_fallthru
      _
    // Predicated region
    $region26: #{tpu_custom_call.1} parent=1 // pred_check
      _
    $region27: #{tpu_custom_call.1} parent=1 // pred_check_branch
      %66 = sbr.rel (0) target = $region29
    $region28: #{tpu_custom_call.1} parent=1 // pred_region
      _
    $region29: #{tpu_custom_call.1} parent=1 // pred_fallthru
      _
    // Predicated region
    $region30: #{tpu_custom_call.1} parent=1 // pred_check
      _
    $region31: #{tpu_custom_call.1} parent=1 // pred_check_branch
      %68 = sbr.rel (0) target = $region33
    $region32: #{tpu_custom_call.1} parent=1 // pred_region
      %69 = dma.done [#allocation3], 128
    $region33: #{tpu_custom_call.1} parent=1 // pred_fallthru
      _
    // Predicated region
    $region34: #{tpu_custom_call.1} parent=1 // pred_check
      _
    $region35: #{tpu_custom_call.1} parent=1 // pred_check_branch
      %71 = sbr.rel (0) target = $region37
    $region36: #{tpu_custom_call.1} parent=1 // pred_region
      %72 = dma.done [#allocation5], 512
    $region37: #{tpu_custom_call.1} parent=1 // pred_fallthru
      _
    // Predicated region
    $region38: #{tpu_custom_call.1} parent=1 // pred_check
      _
    $region39: #{tpu_custom_call.1} parent=1 // pred_check_branch
      %74 = sbr.rel (0) target = $region41
    $region40: #{tpu_custom_call.1} parent=1 // pred_region
      %75 = dma.done [#allocation5], 2048
    $region41: #{tpu_custom_call.1} parent=1 // pred_fallthru
      _
    // Predicated region
    $region42: #{tpu_custom_call.1} parent=1 // pred_check
      _
    $region43: #{tpu_custom_call.1} parent=1 // pred_check_branch
      %77 = sbr.rel (0) target = $region45
    $region44: #{tpu_custom_call.1} parent=1 // pred_region
      %78 = dma.done [#allocation8], 2048
    $region45: #{tpu_custom_call.1} parent=1 // pred_fallthru
      _
    %v79 = vld [vmem:[#allocation2] sm:$0xff]
    %v80 = vld [vmem:[#allocation4] sm:$0xff]
    %v81 = vld [vmem:[#allocation4 + $0x8] sm:$0xff]
    %v82 = vld [vmem:[#allocation4 + $0x10] sm:$0xff]
    %v83 = vld [vmem:[#allocation4 + $0x18] sm:$0xff]
    %v84 = vld [vmem:[%s2] sm:$0x1]
    %v86 = vlaneseq
    %v87 = vshrl.u32 %v86, 7
    %v88 = vsub.s32 0, %v87
    %v89 = vrot.slane %v84, %v88
    %vm91 = vcmask 261120
    %v93 = vsel %vm91, %v79, 0
    %95 = vmatprep.subr.mxu0 0.0
    %96 = vmatpush1.msra.mxu0 %v80
    %97 = vmatprep.subr.mxu0 0.0
    %98 = vmatpush1.msra.mxu0 %v81
    %99 = vmatprep.subr.mxu0 0.0
    %100 = vmatpush1.msra.mxu0 %v82
    %101 = vmatprep.subr.mxu0 0.0
    %102 = vmatpush1.msra.mxu0 %v83
    %103 = vmatprep.subr.mxu0 0.0
    %104 = vmatpush1.msra.mxu0 0.0
    %105 = vmatprep.subr.mxu0 0.0
    %106 = vmatpush1.msra.mxu0 0.0
    %107 = vmatprep.subr.mxu0 0.0
    %108 = vmatpush1.msra.mxu0 0.0
    %109 = vmatprep.subr.mxu0 0.0
    %110 = vmatpush1.msra.mxu0 0.0
    %111 = vmatprep.subr.mxu0 0.0
    %112 = vmatpush1.msra.mxu0 0.0
    %113 = vmatprep.subr.mxu0 0.0
    %114 = vmatpush1.msra.mxu0 0.0
    %115 = vmatprep.subr.mxu0 0.0
    %116 = vmatpush1.msra.mxu0 0.0
    %117 = vmatprep.subr.mxu0 0.0
    %118 = vmatpush1.msra.mxu0 0.0
    %119 = vmatprep.subr.mxu0 0.0
    %120 = vmatpush1.msra.mxu0 0.0
    %121 = vmatprep.subr.mxu0 0.0
    %122 = vmatpush1.msra.mxu0 0.0
    %123 = vmatprep.subr.mxu0 0.0
    %124 = vmatpush1.msra.mxu0 0.0
    %125 = vmatprep.subr.mxu0 0.0
    %126 = vmatpush1.msra.mxu0 0.0
    %127 = vmatprep.subr.mxu0 0.0
    %128 = vmatpush1.msra.mxu0 0.0
    %129 = vmatprep.subr.mxu0 0.0
    %130 = vmatpush1.msra.mxu0 0.0
    %131 = vmatprep.subr.mxu0 0.0
    %132 = vmatpush1.msra.mxu0 0.0
    %133 = vmatprep.subr.mxu0 0.0
    %134 = vmatpush1.msra.mxu0 0.0
    %135 = vmatprep.subr.mxu0 0.0
    %136 = vmatpush1.msra.mxu0 0.0
    %137 = vmatprep.subr.mxu0 0.0
    %138 = vmatpush1.msra.mxu0 0.0
    %139 = vmatprep.subr.mxu0 0.0
    %140 = vmatpush1.msra.mxu0 0.0
    %141 = vmatprep.subr.mxu0 0.0
    %142 = vmatpush1.msra.mxu0 0.0
    %143 = vmatprep.subr.mxu0 0.0
    %144 = vmatpush1.msra.mxu0 0.0
    %145 = vmatprep.subr.mxu0 0.0
    %146 = vmatpush1.msra.mxu0 0.0
    %147 = vmatprep.subr.mxu0 0.0
    %148 = vmatpush1.msra.mxu0 0.0
    %149 = vmatprep.subr.mxu0 0.0
    %150 = vmatpush1.msra.mxu0 0.0
    %151 = vmatprep.subr.mxu0 0.0
    %152 = vmatpush1.msra.mxu0 0.0
    %153 = vmatprep.subr.mxu0 0.0
    %154 = vmatpush1.msra.mxu0 0.0
    %155 = vmatprep.subr.mxu0 0.0
    %156 = vmatpush1.msra.mxu0 0.0
    %157 = vmatprep.subr.mxu0 0.0
    %158 = vmatpush1.msra.mxu0 0.0
    %159 = vmatprep.mubr.f32.mxu0 0.0
    %160 = vmatmul.mubr.f32.gmra.mrb[0].mxu0 %v93
    %v161 = vpop.f32.mrb[0].mxu0
    %v162 = vadd.f32 %v89, %v161
    %v163 = vpop.f32.mrb[0].mxu0
    %164 = vdwg.mxu0
    %v165 = vmax.f32 %v162, 0.0
    %v166 = vld [vmem:[#allocation6] sm:$0xff]
    %v167 = vld [vmem:[#allocation6 + $0x8] sm:$0xff]
    %v168 = vld [vmem:[#allocation6 + $0x10] sm:$0xff]
    %v169 = vld [vmem:[#allocation6 + $0x18] sm:$0xff]
    %v170 = vld [vmem:[#allocation6 + $0x20] sm:$0xff]
    %v171 = vld [vmem:[#allocation6 + $0x28] sm:$0xff]
    %v172 = vld [vmem:[#allocation6 + $0x30] sm:$0xff]
    %v173 = vld [vmem:[#allocation6 + $0x38] sm:$0xff]
    %v174 = vld [vmem:[#allocation6 + $0x40] sm:$0xff]
    %v175 = vld [vmem:[#allocation6 + $0x48] sm:$0xff]
    %v176 = vld [vmem:[#allocation6 + $0x50] sm:$0xff]
    %v177 = vld [vmem:[#allocation6 + $0x58] sm:$0xff]
    %v178 = vld [vmem:[#allocation6 + $0x60] sm:$0xff]
    %v179 = vld [vmem:[#allocation6 + $0x68] sm:$0xff]
    %v180 = vld [vmem:[#allocation6 + $0x70] sm:$0xff]
    %v181 = vld [vmem:[#allocation6 + $0x78] sm:$0xff]
    %v182 = vld [vmem:[%s4] sm:$0x1]
    %v184 = vlaneseq
    %v185 = vshrl.u32 %v184, 7
    %v186 = vsub.s32 0, %v185
    %v187 = vrot.slane %v182, %v186
    %189 = vmatprep.subr.mxu0 0.0
    %190 = vmatpush1.msra.mxu0 %v166
    %191 = vmatprep.subr.mxu0 0.0
    %192 = vmatpush1.msra.mxu0 %v167
    %193 = vmatprep.subr.mxu0 0.0
    %194 = vmatpush1.msra.mxu0 %v168
    %195 = vmatprep.subr.mxu0 0.0
    %196 = vmatpush1.msra.mxu0 %v169
    %197 = vmatprep.subr.mxu0 0.0
    %198 = vmatpush1.msra.mxu0 %v170
    %199 = vmatprep.subr.mxu0 0.0
    %200 = vmatpush1.msra.mxu0 %v171
    %201 = vmatprep.subr.mxu0 0.0
    %202 = vmatpush1.msra.mxu0 %v172
    %203 = vmatprep.subr.mxu0 0.0
    %204 = vmatpush1.msra.mxu0 %v173
    %205 = vmatprep.subr.mxu0 0.0
    %206 = vmatpush1.msra.mxu0 %v174
    %207 = vmatprep.subr.mxu0 0.0
    %208 = vmatpush1.msra.mxu0 %v175
    %209 = vmatprep.subr.mxu0 0.0
    %210 = vmatpush1.msra.mxu0 %v176
    %211 = vmatprep.subr.mxu0 0.0
    %212 = vmatpush1.msra.mxu0 %v177
    %213 = vmatprep.subr.mxu0 0.0
    %214 = vmatpush1.msra.mxu0 %v178
    %215 = vmatprep.subr.mxu0 0.0
    %216 = vmatpush1.msra.mxu0 %v179
    %217 = vmatprep.subr.mxu0 0.0
    %218 = vmatpush1.msra.mxu0 %v180
    %219 = vmatprep.subr.mxu0 0.0
    %220 = vmatpush1.msra.mxu0 %v181
    %221 = vmatprep.subr.mxu0 0.0
    %222 = vmatpush1.msra.mxu0 0.0
    %223 = vmatprep.subr.mxu0 0.0
    %224 = vmatpush1.msra.mxu0 0.0
    %225 = vmatprep.subr.mxu0 0.0
    %226 = vmatpush1.msra.mxu0 0.0
    %227 = vmatprep.subr.mxu0 0.0
    %228 = vmatpush1.msra.mxu0 0.0
    %229 = vmatprep.subr.mxu0 0.0
    %230 = vmatpush1.msra.mxu0 0.0
    %231 = vmatprep.subr.mxu0 0.0
    %232 = vmatpush1.msra.mxu0 0.0
    %233 = vmatprep.subr.mxu0 0.0
    %234 = vmatpush1.msra.mxu0 0.0
    %235 = vmatprep.subr.mxu0 0.0
    %236 = vmatpush1.msra.mxu0 0.0
    %237 = vmatprep.subr.mxu0 0.0
    %238 = vmatpush1.msra.mxu0 0.0
    %239 = vmatprep.subr.mxu0 0.0
    %240 = vmatpush1.msra.mxu0 0.0
    %241 = vmatprep.subr.mxu0 0.0
    %242 = vmatpush1.msra.mxu0 0.0
    %243 = vmatprep.subr.mxu0 0.0
    %244 = vmatpush1.msra.mxu0 0.0
    %245 = vmatprep.subr.mxu0 0.0
    %246 = vmatpush1.msra.mxu0 0.0
    %247 = vmatprep.subr.mxu0 0.0
    %248 = vmatpush1.msra.mxu0 0.0
    %249 = vmatprep.subr.mxu0 0.0
    %250 = vmatpush1.msra.mxu0 0.0
    %251 = vmatprep.subr.mxu0 0.0
    %252 = vmatpush1.msra.mxu0 0.0
    %253 = vmatprep.mubr.f32.mxu0 0.0
    %254 = vmatmul.mubr.f32.gmra.mrb[0].mxu0 %v165
    %v255 = vpop.f32.mrb[0].mxu0
    %v256 = vadd.f32 %v187, %v255
    %v257 = vpop.f32.mrb[0].mxu0
    %258 = vdwg.mxu0
    %v259 = vmax.f32 %v256, 0.0
    %v260 = vld [vmem:[#allocation7] sm:$0xff]
    %v261 = vld [vmem:[#allocation7 + $0x8] sm:$0xff]
    %v262 = vld [vmem:[#allocation7 + $0x10] sm:$0xff]
    %v263 = vld [vmem:[#allocation7 + $0x18] sm:$0xff]
    %v264 = vld [vmem:[#allocation7 + $0x20] sm:$0xff]
    %v265 = vld [vmem:[#allocation7 + $0x28] sm:$0xff]
    %v266 = vld [vmem:[#allocation7 + $0x30] sm:$0xff]
    %v267 = vld [vmem:[#allocation7 + $0x38] sm:$0xff]
    %v268 = vld [vmem:[#allocation7 + $0x40] sm:$0xff]
    %v269 = vld [vmem:[#allocation7 + $0x48] sm:$0xff]
    %v270 = vld [vmem:[#allocation7 + $0x50] sm:$0xff]
    %v271 = vld [vmem:[#allocation7 + $0x58] sm:$0xff]
    %v272 = vld [vmem:[#allocation7 + $0x60] sm:$0xff]
    %v273 = vld [vmem:[#allocation7 + $0x68] sm:$0xff]
    %v274 = vld [vmem:[#allocation7 + $0x70] sm:$0xff]
    %v275 = vld [vmem:[#allocation7 + $0x78] sm:$0xff]
    %v276 = vld [vmem:[%s6] sm:$0x1]
    %v278 = vlaneseq
    %v279 = vshrl.u32 %v278, 7
    %v280 = vsub.s32 0, %v279
    %v281 = vrot.slane %v276, %v280
    %283 = vmatprep.subr.mxu0 0.0
    %284 = vmatpush1.msra.mxu0 %v260
    %285 = vmatprep.subr.mxu0 0.0
    %286 = vmatpush1.msra.mxu0 %v261
    %287 = vmatprep.subr.mxu0 0.0
    %288 = vmatpush1.msra.mxu0 %v262
    %289 = vmatprep.subr.mxu0 0.0
    %290 = vmatpush1.msra.mxu0 %v263
    %291 = vmatprep.subr.mxu0 0.0
    %292 = vmatpush1.msra.mxu0 %v264
    %293 = vmatprep.subr.mxu0 0.0
    %294 = vmatpush1.msra.mxu0 %v265
    %295 = vmatprep.subr.mxu0 0.0
    %296 = vmatpush1.msra.mxu0 %v266
    %297 = vmatprep.subr.mxu0 0.0
    %298 = vmatpush1.msra.mxu0 %v267
    %299 = vmatprep.subr.mxu0 0.0
    %300 = vmatpush1.msra.mxu0 %v268
    %301 = vmatprep.subr.mxu0 0.0
    %302 = vmatpush1.msra.mxu0 %v269
    %303 = vmatprep.subr.mxu0 0.0
    %304 = vmatpush1.msra.mxu0 %v270
    %305 = vmatprep.subr.mxu0 0.0
    %306 = vmatpush1.msra.mxu0 %v271
    %307 = vmatprep.subr.mxu0 0.0
    %308 = vmatpush1.msra.mxu0 %v272
    %309 = vmatprep.subr.mxu0 0.0
    %310 = vmatpush1.msra.mxu0 %v273
    %311 = vmatprep.subr.mxu0 0.0
    %312 = vmatpush1.msra.mxu0 %v274
    %313 = vmatprep.subr.mxu0 0.0
    %314 = vmatpush1.msra.mxu0 %v275
    %315 = vmatprep.subr.mxu0 0.0
    %316 = vmatpush1.msra.mxu0 0.0
    %317 = vmatprep.subr.mxu0 0.0
    %318 = vmatpush1.msra.mxu0 0.0
    %319 = vmatprep.subr.mxu0 0.0
    %320 = vmatpush1.msra.mxu0 0.0
    %321 = vmatprep.subr.mxu0 0.0
    %322 = vmatpush1.msra.mxu0 0.0
    %323 = vmatprep.subr.mxu0 0.0
    %324 = vmatpush1.msra.mxu0 0.0
    %325 = vmatprep.subr.mxu0 0.0
    %326 = vmatpush1.msra.mxu0 0.0
    %327 = vmatprep.subr.mxu0 0.0
    %328 = vmatpush1.msra.mxu0 0.0
    %329 = vmatprep.subr.mxu0 0.0
    %330 = vmatpush1.msra.mxu0 0.0
    %331 = vmatprep.subr.mxu0 0.0
    %332 = vmatpush1.msra.mxu0 0.0
    %333 = vmatprep.subr.mxu0 0.0
    %334 = vmatpush1.msra.mxu0 0.0
    %335 = vmatprep.subr.mxu0 0.0
    %336 = vmatpush1.msra.mxu0 0.0
    %337 = vmatprep.subr.mxu0 0.0
    %338 = vmatpush1.msra.mxu0 0.0
    %339 = vmatprep.subr.mxu0 0.0
    %340 = vmatpush1.msra.mxu0 0.0
    %341 = vmatprep.subr.mxu0 0.0
    %342 = vmatpush1.msra.mxu0 0.0
    %343 = vmatprep.subr.mxu0 0.0
    %344 = vmatpush1.msra.mxu0 0.0
    %345 = vmatprep.subr.mxu0 0.0
    %346 = vmatpush1.msra.mxu0 0.0
    %347 = vmatprep.mubr.f32.mxu0 0.0
    %348 = vmatmul.mubr.f32.gmra.mrb[0].mxu0 %v259
    %v349 = vpop.f32.mrb[0].mxu0
    %v350 = vadd.f32 %v281, %v349
    %v351 = vpop.f32.mrb[0].mxu0
    %352 = vdwg.mxu0
    %v353 = vxor.u32 %v350, 2147483648
    %v354 = vmul.f32 %v353, 1.442695
    %v355 = vpow.pop %v354
    %v356 = vadd.f32 %v355, 1.0
    %v357 = vrcp.pop %v356
    %v358 = vmul.f32 1.0, %v357
    %vm359 = vcmask 7168
    %360 = vst.msk [vmem:[%s7] sm:$0xff] %vm359, %v358
    // Predicated region
    $region46: #{tpu_custom_call.1} parent=1 // pred_check
      _
    $region47: #{tpu_custom_call.1} parent=1 // pred_check_branch
      %362 = sbr.rel (0) target = $region49
    $region48: #{tpu_custom_call.1} parent=1 // pred_region
      _
    $region49: #{tpu_custom_call.1} parent=1 // pred_fallthru
      _
    // Predicated region
    $region50: #{tpu_custom_call.1} parent=1 // pred_check
      _
    $region51: #{tpu_custom_call.1} parent=1 // pred_check_branch
      %364 = sbr.rel (0) target = $region53
    $region52: #{tpu_custom_call.1} parent=1 // pred_region
      _
    $region53: #{tpu_custom_call.1} parent=1 // pred_fallthru
      _
    %365 = vsyncpa [#allocation3], 1
    %366 = vsyncpa [#allocation5], 1
    %367 = vsyncpa [#allocation8], 1

</llo_original>
